<compile_context>
chip_gen: v5e
topology: v5e:2x2
jax: 0.10.0
libtpu: 0.0.40
codegen_flags: <defaults>
</compile_context>

<pallas_src>
import jax
import jax.numpy as jnp
from jax import lax
from jax.experimental import pallas as pl
from jax.experimental.pallas import tpu as pltpu  # noqa: F401  (TPU backend)

BATCH = 2
SEQ = 8
HIDDEN = 32
HEADS = 4
FF_DIM = 64
HEAD_DIM = HIDDEN // HEADS
ROWS = BATCH * SEQ
EPS = 1e-5  # nn.LayerNorm default

# Row layout of the packed vector-parameter slab (each row padded to 128 lanes).
_ROW_BQKV = 0   # [:3*HIDDEN]  (Q part pre-scaled by 1/sqrt(HEAD_DIM))
_ROW_BO = 1     # [:HIDDEN]
_ROW_G1 = 2     # [:HIDDEN]
_ROW_BE1 = 3    # [:HIDDEN]
_ROW_G2 = 4     # [:HIDDEN]
_ROW_BE2 = 5    # [:HIDDEN]
_ROW_B1 = 6     # [:FF_DIM]
_ROW_B2 = 7     # [:HIDDEN]
VEC_ROWS = 8
VEC_COLS = 128


def encoder_layer_kernel(x_ref, wqkv_ref, wo_ref, w1_ref, w2_ref, vec_ref,
                         o_ref):
    # Whole problem in one invocation; everything resident in VMEM.
    x = x_ref[...]                                  # (B*S, H) f32
    vec = vec_ref[...]                              # (8, 128) packed vectors
    bqkv = vec[_ROW_BQKV:_ROW_BQKV + 1, :3 * HIDDEN]   # (1, 96)
    bo = vec[_ROW_BO:_ROW_BO + 1, :HIDDEN]
    g1 = vec[_ROW_G1:_ROW_G1 + 1, :HIDDEN]
    be1 = vec[_ROW_BE1:_ROW_BE1 + 1, :HIDDEN]
    g2 = vec[_ROW_G2:_ROW_G2 + 1, :HIDDEN]
    be2 = vec[_ROW_BE2:_ROW_BE2 + 1, :HIDDEN]
    b1 = vec[_ROW_B1:_ROW_B1 + 1, :FF_DIM]
    b2 = vec[_ROW_B2:_ROW_B2 + 1, :HIDDEN]

    def layernorm(v, g, b):
        mu = jnp.mean(v, axis=-1, keepdims=True)
        var = jnp.mean((v - mu) ** 2, axis=-1, keepdims=True)
        return (v - mu) * lax.rsqrt(var + EPS) * g + b

    # ---- norm1 + fused QKV projection (batch folded into rows) ----
    xn = layernorm(x, g1, be1)                      # (B*S, H) f32
    qkv = jnp.dot(xn.astype(jnp.bfloat16), wqkv_ref[...],
                  preferred_element_type=jnp.float32) + bqkv
    # Q is already scaled by 1/sqrt(HEAD_DIM) (folded into wqkv/bqkv at pack time).
    q = qkv[:, 0 * HIDDEN:1 * HIDDEN]
    k = qkv[:, 1 * HIDDEN:2 * HIDDEN]
    v = qkv[:, 2 * HIDDEN:3 * HIDDEN]

    # ---- scores for all (batch, head) tiles; no K transpose materialized ----
    s_blocks = []
    for b in range(BATCH):                           # static, BATCH=2
        rows = slice(b * SEQ, (b + 1) * SEQ)
        for h in range(HEADS):                       # static, HEADS=4
            lanes = slice(h * HEAD_DIM, (h + 1) * HEAD_DIM)
            qh = q[rows, lanes].astype(jnp.bfloat16)            # (S, HD)
            kh = k[rows, lanes].astype(jnp.bfloat16)            # (S, HD)
            # contract last dim of both operands -> (S, S), no kh.T relayout
            s_blocks.append(
                lax.dot_general(qh, kh, (((1,), (1,)), ((), ())),
                                preferred_element_type=jnp.float32))

    # ---- one batched softmax pass over all 8 score blocks ----
    s_all = jnp.concatenate(s_blocks, axis=0)        # (B*HEADS*S, S) = (64, 8)
    s_all = s_all - jnp.max(s_all, axis=-1, keepdims=True)
    p_all = jnp.exp(s_all)
    p_all = p_all * pl.reciprocal(jnp.sum(p_all, axis=-1, keepdims=True),
                                  approx=True)

    # ---- P @ V and output projection distributed over heads (no scratch) ----
    attn_rows = []
    for b in range(BATCH):
        rows = slice(b * SEQ, (b + 1) * SEQ)
        acc = jnp.zeros((SEQ, HIDDEN), jnp.float32)
        for h in range(HEADS):
            lanes = slice(h * HEAD_DIM, (h + 1) * HEAD_DIM)
            idx = b * HEADS + h
            ph = p_all[idx * SEQ:(idx + 1) * SEQ, :].astype(jnp.bfloat16)
            vh = v[rows, lanes].astype(jnp.bfloat16)
            oh = jnp.dot(ph, vh, preferred_element_type=jnp.float32)  # (S, HD)
            acc = acc + jnp.dot(oh.astype(jnp.bfloat16), wo_ref[h],
                                preferred_element_type=jnp.float32)   # (S, H)
        attn_rows.append(acc)
    attn = jnp.concatenate(attn_rows, axis=0) + bo   # (B*S, H)
    x = x + attn                                     # dropout = identity (eval)

    # ---- norm2 + feed-forward ----
    xn2 = layernorm(x, g2, be2)
    h1 = jnp.maximum(
        jnp.dot(xn2.astype(jnp.bfloat16), w1_ref[...],
                preferred_element_type=jnp.float32) + b1, 0.0)
    ff = jnp.dot(h1.astype(jnp.bfloat16), w2_ref[...],
                 preferred_element_type=jnp.float32) + b2
    o_ref[...] = x + ff


def encoder_layer(x, packed_params):
    """x: (B, S, H) f32; packed_params from pack_params()."""
    B, S, H = x.shape
    wqkv, wo, w1, w2, vec = packed_params
    x2 = x.reshape(B * S, H)          # fold batch into rows (wrapper-side, free)
    out = pl.pallas_call(
        encoder_layer_kernel,
        out_shape=jax.ShapeDtypeStruct((B * S, H), jnp.float32),
    )(x2, wqkv, wo, w1, w2, vec)
    return out.reshape(B, S, H)


def init_params(key):
    ks = jax.random.split(key, 8)
    sc = 0.1
    # weights stored already transposed (in_features, out_features): y = x @ W + b
    wqkv = sc * jax.random.normal(ks[0], (HIDDEN, 3 * HIDDEN), jnp.float32)
    bqkv = sc * jax.random.normal(ks[1], (1, 3 * HIDDEN), jnp.float32)
    wo = sc * jax.random.normal(ks[2], (HIDDEN, HIDDEN), jnp.float32)
    bo = sc * jax.random.normal(ks[3], (1, HIDDEN), jnp.float32)
    g1 = jnp.ones((1, HIDDEN), jnp.float32)
    be1 = jnp.zeros((1, HIDDEN), jnp.float32)
    g2 = jnp.ones((1, HIDDEN), jnp.float32)
    be2 = jnp.zeros((1, HIDDEN), jnp.float32)
    w1 = sc * jax.random.normal(ks[4], (HIDDEN, FF_DIM), jnp.float32)
    b1 = sc * jax.random.normal(ks[5], (1, FF_DIM), jnp.float32)
    w2 = sc * jax.random.normal(ks[6], (FF_DIM, HIDDEN), jnp.float32)
    b2 = sc * jax.random.normal(ks[7], (1, HIDDEN), jnp.float32)
    return [wqkv, bqkv, wo, bo, g1, be1, g2, be2, w1, b1, w2, b2]


def pack_params(params):
    """One-time parameter prep (outside the kernel hot path):
    - fold 1/sqrt(HEAD_DIM) into the Q projection,
    - cast matmul weights to bf16 (MXU operands),
    - pre-split Wo per head as (HEADS, HEAD_DIM, HIDDEN),
    - pack the eight small vectors into a single (8, 128) f32 slab."""
    wqkv, bqkv, wo, bo, g1, be1, g2, be2, w1, b1, w2, b2 = params
    scale = 1.0 / (HEAD_DIM ** 0.5)
    wqkv = wqkv.at[:, :HIDDEN].multiply(scale)
    bqkv = bqkv.at[:, :HIDDEN].multiply(scale)

    vec = jnp.zeros((VEC_ROWS, VEC_COLS), jnp.float32)

    def put(slab, row, val):
        flat = val.reshape(-1)
        return slab.at[row, :flat.shape[0]].set(flat)

    vec = put(vec, _ROW_BQKV, bqkv)
    vec = put(vec, _ROW_BO, bo)
    vec = put(vec, _ROW_G1, g1)
    vec = put(vec, _ROW_BE1, be1)
    vec = put(vec, _ROW_G2, g2)
    vec = put(vec, _ROW_BE2, be2)
    vec = put(vec, _ROW_B1, b1)
    vec = put(vec, _ROW_B2, b2)

    wqkv16 = wqkv.astype(jnp.bfloat16)
    wo16 = wo.reshape(HEADS, HEAD_DIM, HIDDEN).astype(jnp.bfloat16)
    w116 = w1.astype(jnp.bfloat16)
    w216 = w2.astype(jnp.bfloat16)
    return [wqkv16, wo16, w116, w216, vec]


def reference(x, params):
    wqkv, bqkv, wo, bo, g1, be1, g2, be2, w1, b1, w2, b2 = params

    def ln(v, g, b):
        mu = jnp.mean(v, axis=-1, keepdims=True)
        var = jnp.mean((v - mu) ** 2, axis=-1, keepdims=True)
        return (v - mu) * lax.rsqrt(var + EPS) * g[0] + b[0]

    xn = ln(x, g1, be1)
    qkv = xn @ wqkv + bqkv[0]
    q, k, v = jnp.split(qkv, 3, axis=-1)
    B, S, H = x.shape
    qh = q.reshape(B, S, HEADS, HEAD_DIM).transpose(0, 2, 1, 3)
    kh = k.reshape(B, S, HEADS, HEAD_DIM).transpose(0, 2, 1, 3)
    vh = v.reshape(B, S, HEADS, HEAD_DIM).transpose(0, 2, 1, 3)
    s = jnp.einsum("bhqd,bhkd->bhqk", qh, kh) / (HEAD_DIM ** 0.5)
    p = jax.nn.softmax(s, axis=-1)
    o = jnp.einsum("bhqk,bhkd->bhqd", p, vh).transpose(0, 2, 1, 3).reshape(B, S, H)
    attn = o @ wo + bo[0]
    x = x + attn
    xn2 = ln(x, g2, be2)
    ff = jnp.maximum(xn2 @ w1 + b1[0], 0.0) @ w2 + b2[0]
    return x + ff


if __name__ == "__main__":
    key = jax.random.PRNGKey(0)
    kx, kp = jax.random.split(key)
    x = jax.random.normal(kx, (BATCH, SEQ, HIDDEN), jnp.float32)
    params = init_params(kp)
    packed = pack_params(params)      # one-time prep, not part of the kernel path

    out = encoder_layer(x, packed)
    out = jax.block_until_ready(out)

    ref = reference(x, params)
    assert out.shape == (BATCH, SEQ, HIDDEN)
    # tolerance loosened for bf16 matmul operands + approx-reciprocal softmax
    assert jnp.allclose(out, ref, atol=2e-2, rtol=2e-2), "mismatch vs JAX reference"
    print("KERNEL_OK")
</pallas_src>

<mosaic_0001>
module attributes {stable_mosaic.version = 11 : i64} {
  func.func @encoder_layer_kernel(%arg0: memref<16x32xf32, #tpu.memory_space<vmem>>, %arg1: memref<32x96xbf16, #tpu.memory_space<vmem>>, %arg2: memref<4x8x32xbf16, #tpu.memory_space<vmem>>, %arg3: memref<32x64xbf16, #tpu.memory_space<vmem>>, %arg4: memref<64x32xbf16, #tpu.memory_space<vmem>>, %arg5: memref<8x128xf32, #tpu.memory_space<vmem>>, %arg6: memref<16x32xf32, #tpu.memory_space<vmem>>) attributes {dimension_semantics = [], scalar_prefetch = 0 : i64, scratch_operands = 0 : i64, tpu.core_type = #tpu.core_type<tc>} {
    %c0 = arith.constant 0 : index
    %c0_0 = arith.constant 0 : index
    %0 = vector.load %arg0[%c0, %c0_0] : memref<16x32xf32, #tpu.memory_space<vmem>>, vector<16x32xf32>
    %c0_1 = arith.constant 0 : index
    %c0_2 = arith.constant 0 : index
    %1 = vector.load %arg5[%c0_1, %c0_2] : memref<8x128xf32, #tpu.memory_space<vmem>>, vector<8x128xf32>
    %2 = vector.extract_strided_slice %1 {offsets = [0, 0], sizes = [1, 96], strides = [1, 1]} : vector<8x128xf32> to vector<1x96xf32>
    %3 = vector.extract_strided_slice %1 {offsets = [1, 0], sizes = [1, 32], strides = [1, 1]} : vector<8x128xf32> to vector<1x32xf32>
    %4 = vector.extract_strided_slice %1 {offsets = [2, 0], sizes = [1, 32], strides = [1, 1]} : vector<8x128xf32> to vector<1x32xf32>
    %5 = vector.extract_strided_slice %1 {offsets = [3, 0], sizes = [1, 32], strides = [1, 1]} : vector<8x128xf32> to vector<1x32xf32>
    %6 = vector.extract_strided_slice %1 {offsets = [4, 0], sizes = [1, 32], strides = [1, 1]} : vector<8x128xf32> to vector<1x32xf32>
    %7 = vector.extract_strided_slice %1 {offsets = [5, 0], sizes = [1, 32], strides = [1, 1]} : vector<8x128xf32> to vector<1x32xf32>
    %8 = vector.extract_strided_slice %1 {offsets = [6, 0], sizes = [1, 64], strides = [1, 1]} : vector<8x128xf32> to vector<1x64xf32>
    %9 = vector.extract_strided_slice %1 {offsets = [7, 0], sizes = [1, 32], strides = [1, 1]} : vector<8x128xf32> to vector<1x32xf32>
    %cst = arith.constant dense<0.000000e+00> : vector<16xf32>
    %10 = vector.multi_reduction <add>, %0, %cst [1] : vector<16x32xf32> to vector<16xf32>
    %11 = vector.shape_cast %10 : vector<16xf32> to vector<16x1xf32>
    %cst_3 = arith.constant 3.200000e+01 : f32
    %12 = vector.broadcast %cst_3 : f32 to vector<16x1xf32>
    %13 = arith.divf %11, %12 : vector<16x1xf32>
    %14 = vector.broadcast %13 : vector<16x1xf32> to vector<16x32xf32>
    %15 = arith.subf %0, %14 : vector<16x32xf32>
    %16 = arith.mulf %15, %15 : vector<16x32xf32>
    %cst_4 = arith.constant dense<0.000000e+00> : vector<16xf32>
    %17 = vector.multi_reduction <add>, %16, %cst_4 [1] : vector<16x32xf32> to vector<16xf32>
    %18 = vector.shape_cast %17 : vector<16xf32> to vector<16x1xf32>
    %cst_5 = arith.constant 3.200000e+01 : f32
    %19 = vector.broadcast %cst_5 : f32 to vector<16x1xf32>
    %20 = arith.divf %18, %19 : vector<16x1xf32>
    %21 = vector.broadcast %13 : vector<16x1xf32> to vector<16x32xf32>
    %22 = arith.subf %0, %21 : vector<16x32xf32>
    %cst_6 = arith.constant 9.99999974E-6 : f32
    %23 = vector.broadcast %cst_6 : f32 to vector<16x1xf32>
    %24 = arith.addf %20, %23 : vector<16x1xf32>
    %25 = math.rsqrt %24 : vector<16x1xf32>
    %26 = vector.broadcast %25 : vector<16x1xf32> to vector<16x32xf32>
    %27 = arith.mulf %22, %26 : vector<16x32xf32>
    %28 = vector.broadcast %4 : vector<1x32xf32> to vector<16x32xf32>
    %29 = arith.mulf %27, %28 : vector<16x32xf32>
    %30 = vector.broadcast %5 : vector<1x32xf32> to vector<16x32xf32>
    %31 = arith.addf %29, %30 : vector<16x32xf32>
    %32 = arith.truncf %31 : vector<16x32xf32> to vector<16x32xbf16>
    %c0_7 = arith.constant 0 : index
    %c0_8 = arith.constant 0 : index
    %33 = vector.load %arg1[%c0_7, %c0_8] : memref<32x96xbf16, #tpu.memory_space<vmem>>, vector<32x96xbf16>
    %cst_9 = arith.constant dense<0.000000e+00> : vector<16x96xf32>
    %34 = tpu.matmul %32, %33, %cst_9 {dimension_numbers = #tpu.dot_dimension_numbers<[1], [0], [0], [1], [0, 0, 1, 1], [], []>} : vector<16x32xbf16>, vector<32x96xbf16>, vector<16x96xf32> -> vector<16x96xf32>
    %35 = vector.broadcast %2 : vector<1x96xf32> to vector<16x96xf32>
    %36 = arith.addf %34, %35 : vector<16x96xf32>
    %37 = vector.extract_strided_slice %36 {offsets = [0, 0], sizes = [16, 32], strides = [1, 1]} : vector<16x96xf32> to vector<16x32xf32>
    %38 = vector.extract_strided_slice %36 {offsets = [0, 32], sizes = [16, 32], strides = [1, 1]} : vector<16x96xf32> to vector<16x32xf32>
    %39 = vector.extract_strided_slice %36 {offsets = [0, 64], sizes = [16, 32], strides = [1, 1]} : vector<16x96xf32> to vector<16x32xf32>
    %40 = vector.extract_strided_slice %37 {offsets = [0, 0], sizes = [8, 8], strides = [1, 1]} : vector<16x32xf32> to vector<8x8xf32>
    %41 = arith.truncf %40 : vector<8x8xf32> to vector<8x8xbf16>
    %42 = vector.extract_strided_slice %38 {offsets = [0, 0], sizes = [8, 8], strides = [1, 1]} : vector<16x32xf32> to vector<8x8xf32>
    %43 = arith.truncf %42 : vector<8x8xf32> to vector<8x8xbf16>
    %cst_10 = arith.constant dense<0.000000e+00> : vector<8x8xf32>
    %44 = tpu.matmul %41, %43, %cst_10 {dimension_numbers = #tpu.dot_dimension_numbers<[1], [1], [0], [0], [0, 0, 1, 0], [], []>} : vector<8x8xbf16>, vector<8x8xbf16>, vector<8x8xf32> -> vector<8x8xf32>
    %45 = vector.extract_strided_slice %37 {offsets = [0, 8], sizes = [8, 8], strides = [1, 1]} : vector<16x32xf32> to vector<8x8xf32>
    %46 = arith.truncf %45 : vector<8x8xf32> to vector<8x8xbf16>
    %47 = vector.extract_strided_slice %38 {offsets = [0, 8], sizes = [8, 8], strides = [1, 1]} : vector<16x32xf32> to vector<8x8xf32>
    %48 = arith.truncf %47 : vector<8x8xf32> to vector<8x8xbf16>
    %cst_11 = arith.constant dense<0.000000e+00> : vector<8x8xf32>
    %49 = tpu.matmul %46, %48, %cst_11 {dimension_numbers = #tpu.dot_dimension_numbers<[1], [1], [0], [0], [0, 0, 1, 0], [], []>} : vector<8x8xbf16>, vector<8x8xbf16>, vector<8x8xf32> -> vector<8x8xf32>
    %50 = vector.extract_strided_slice %37 {offsets = [0, 16], sizes = [8, 8], strides = [1, 1]} : vector<16x32xf32> to vector<8x8xf32>
    %51 = arith.truncf %50 : vector<8x8xf32> to vector<8x8xbf16>
    %52 = vector.extract_strided_slice %38 {offsets = [0, 16], sizes = [8, 8], strides = [1, 1]} : vector<16x32xf32> to vector<8x8xf32>
    %53 = arith.truncf %52 : vector<8x8xf32> to vector<8x8xbf16>
    %cst_12 = arith.constant dense<0.000000e+00> : vector<8x8xf32>
    %54 = tpu.matmul %51, %53, %cst_12 {dimension_numbers = #tpu.dot_dimension_numbers<[1], [1], [0], [0], [0, 0, 1, 0], [], []>} : vector<8x8xbf16>, vector<8x8xbf16>, vector<8x8xf32> -> vector<8x8xf32>
    %55 = vector.extract_strided_slice %37 {offsets = [0, 24], sizes = [8, 8], strides = [1, 1]} : vector<16x32xf32> to vector<8x8xf32>
    %56 = arith.truncf %55 : vector<8x8xf32> to vector<8x8xbf16>
    %57 = vector.extract_strided_slice %38 {offsets = [0, 24], sizes = [8, 8], strides = [1, 1]} : vector<16x32xf32> to vector<8x8xf32>
    %58 = arith.truncf %57 : vector<8x8xf32> to vector<8x8xbf16>
    %cst_13 = arith.constant dense<0.000000e+00> : vector<8x8xf32>
    %59 = tpu.matmul %56, %58, %cst_13 {dimension_numbers = #tpu.dot_dimension_numbers<[1], [1], [0], [0], [0, 0, 1, 0], [], []>} : vector<8x8xbf16>, vector<8x8xbf16>, vector<8x8xf32> -> vector<8x8xf32>
    %60 = vector.extract_strided_slice %37 {offsets = [8, 0], sizes = [8, 8], strides = [1, 1]} : vector<16x32xf32> to vector<8x8xf32>
    %61 = arith.truncf %60 : vector<8x8xf32> to vector<8x8xbf16>
    %62 = vector.extract_strided_slice %38 {offsets = [8, 0], sizes = [8, 8], strides = [1, 1]} : vector<16x32xf32> to vector<8x8xf32>
    %63 = arith.truncf %62 : vector<8x8xf32> to vector<8x8xbf16>
    %cst_14 = arith.constant dense<0.000000e+00> : vector<8x8xf32>
    %64 = tpu.matmul %61, %63, %cst_14 {dimension_numbers = #tpu.dot_dimension_numbers<[1], [1], [0], [0], [0, 0, 1, 0], [], []>} : vector<8x8xbf16>, vector<8x8xbf16>, vector<8x8xf32> -> vector<8x8xf32>
    %65 = vector.extract_strided_slice %37 {offsets = [8, 8], sizes = [8, 8], strides = [1, 1]} : vector<16x32xf32> to vector<8x8xf32>
    %66 = arith.truncf %65 : vector<8x8xf32> to vector<8x8xbf16>
    %67 = vector.extract_strided_slice %38 {offsets = [8, 8], sizes = [8, 8], strides = [1, 1]} : vector<16x32xf32> to vector<8x8xf32>
    %68 = arith.truncf %67 : vector<8x8xf32> to vector<8x8xbf16>
    %cst_15 = arith.constant dense<0.000000e+00> : vector<8x8xf32>
    %69 = tpu.matmul %66, %68, %cst_15 {dimension_numbers = #tpu.dot_dimension_numbers<[1], [1], [0], [0], [0, 0, 1, 0], [], []>} : vector<8x8xbf16>, vector<8x8xbf16>, vector<8x8xf32> -> vector<8x8xf32>
    %70 = vector.extract_strided_slice %37 {offsets = [8, 16], sizes = [8, 8], strides = [1, 1]} : vector<16x32xf32> to vector<8x8xf32>
    %71 = arith.truncf %70 : vector<8x8xf32> to vector<8x8xbf16>
    %72 = vector.extract_strided_slice %38 {offsets = [8, 16], sizes = [8, 8], strides = [1, 1]} : vector<16x32xf32> to vector<8x8xf32>
    %73 = arith.truncf %72 : vector<8x8xf32> to vector<8x8xbf16>
    %cst_16 = arith.constant dense<0.000000e+00> : vector<8x8xf32>
    %74 = tpu.matmul %71, %73, %cst_16 {dimension_numbers = #tpu.dot_dimension_numbers<[1], [1], [0], [0], [0, 0, 1, 0], [], []>} : vector<8x8xbf16>, vector<8x8xbf16>, vector<8x8xf32> -> vector<8x8xf32>
    %75 = vector.extract_strided_slice %37 {offsets = [8, 24], sizes = [8, 8], strides = [1, 1]} : vector<16x32xf32> to vector<8x8xf32>
    %76 = arith.truncf %75 : vector<8x8xf32> to vector<8x8xbf16>
    %77 = vector.extract_strided_slice %38 {offsets = [8, 24], sizes = [8, 8], strides = [1, 1]} : vector<16x32xf32> to vector<8x8xf32>
    %78 = arith.truncf %77 : vector<8x8xf32> to vector<8x8xbf16>
    %cst_17 = arith.constant dense<0.000000e+00> : vector<8x8xf32>
    %79 = tpu.matmul %76, %78, %cst_17 {dimension_numbers = #tpu.dot_dimension_numbers<[1], [1], [0], [0], [0, 0, 1, 0], [], []>} : vector<8x8xbf16>, vector<8x8xbf16>, vector<8x8xf32> -> vector<8x8xf32>
    %80 = tpu.concatenate %44, %49, %54, %59, %64, %69, %74, %79 in 0 : vector<8x8xf32>, vector<8x8xf32>, vector<8x8xf32>, vector<8x8xf32>, vector<8x8xf32>, vector<8x8xf32>, vector<8x8xf32>, vector<8x8xf32> -> vector<64x8xf32>
    %cst_18 = arith.constant dense<0xFF800000> : vector<64xf32>
    %81 = vector.multi_reduction <maximumf>, %80, %cst_18 [1] : vector<64x8xf32> to vector<64xf32>
    %82 = vector.shape_cast %81 : vector<64xf32> to vector<64x1xf32>
    %83 = vector.broadcast %82 : vector<64x1xf32> to vector<64x8xf32>
    %84 = arith.subf %80, %83 : vector<64x8xf32>
    %85 = math.exp %84 : vector<64x8xf32>
    %cst_19 = arith.constant dense<0.000000e+00> : vector<64xf32>
    %86 = vector.multi_reduction <add>, %85, %cst_19 [1] : vector<64x8xf32> to vector<64xf32>
    %87 = vector.shape_cast %86 : vector<64xf32> to vector<64x1xf32>
    %88 = tpu.reciprocal %87 {approx = true} : vector<64x1xf32> -> vector<64x1xf32>
    %89 = vector.broadcast %88 : vector<64x1xf32> to vector<64x8xf32>
    %90 = arith.mulf %85, %89 : vector<64x8xf32>
    %cst_20 = arith.constant 0.000000e+00 : f32
    %91 = vector.broadcast %cst_20 : f32 to vector<8x32xf32>
    %92 = vector.extract_strided_slice %90 {offsets = [0, 0], sizes = [8, 8], strides = [1, 1]} : vector<64x8xf32> to vector<8x8xf32>
    %93 = arith.truncf %92 : vector<8x8xf32> to vector<8x8xbf16>
    %94 = vector.extract_strided_slice %39 {offsets = [0, 0], sizes = [8, 8], strides = [1, 1]} : vector<16x32xf32> to vector<8x8xf32>
    %95 = arith.truncf %94 : vector<8x8xf32> to vector<8x8xbf16>
    %cst_21 = arith.constant dense<0.000000e+00> : vector<8x8xf32>
    %96 = tpu.matmul %93, %95, %cst_21 {dimension_numbers = #tpu.dot_dimension_numbers<[1], [0], [0], [1], [0, 0, 1, 1], [], []>} : vector<8x8xbf16>, vector<8x8xbf16>, vector<8x8xf32> -> vector<8x8xf32>
    %97 = arith.truncf %96 : vector<8x8xf32> to vector<8x8xbf16>
    %c0_22 = arith.constant 0 : index
    %c0_23 = arith.constant 0 : index
    %c0_24 = arith.constant 0 : index
    %98 = vector.load %arg2[%c0_22, %c0_23, %c0_24] : memref<4x8x32xbf16, #tpu.memory_space<vmem>>, vector<1x8x32xbf16>
    %99 = vector.shape_cast %98 : vector<1x8x32xbf16> to vector<8x32xbf16>
    %cst_25 = arith.constant dense<0.000000e+00> : vector<8x32xf32>
    %100 = tpu.matmul %97, %99, %cst_25 {dimension_numbers = #tpu.dot_dimension_numbers<[1], [0], [0], [1], [0, 0, 1, 1], [], []>} : vector<8x8xbf16>, vector<8x32xbf16>, vector<8x32xf32> -> vector<8x32xf32>
    %101 = arith.addf %91, %100 : vector<8x32xf32>
    %102 = vector.extract_strided_slice %90 {offsets = [8, 0], sizes = [8, 8], strides = [1, 1]} : vector<64x8xf32> to vector<8x8xf32>
    %103 = arith.truncf %102 : vector<8x8xf32> to vector<8x8xbf16>
    %104 = vector.extract_strided_slice %39 {offsets = [0, 8], sizes = [8, 8], strides = [1, 1]} : vector<16x32xf32> to vector<8x8xf32>
    %105 = arith.truncf %104 : vector<8x8xf32> to vector<8x8xbf16>
    %cst_26 = arith.constant dense<0.000000e+00> : vector<8x8xf32>
    %106 = tpu.matmul %103, %105, %cst_26 {dimension_numbers = #tpu.dot_dimension_numbers<[1], [0], [0], [1], [0, 0, 1, 1], [], []>} : vector<8x8xbf16>, vector<8x8xbf16>, vector<8x8xf32> -> vector<8x8xf32>
    %107 = arith.truncf %106 : vector<8x8xf32> to vector<8x8xbf16>
    %c1 = arith.constant 1 : index
    %c0_27 = arith.constant 0 : index
    %c0_28 = arith.constant 0 : index
    %108 = vector.load %arg2[%c1, %c0_27, %c0_28] : memref<4x8x32xbf16, #tpu.memory_space<vmem>>, vector<1x8x32xbf16>
    %109 = vector.shape_cast %108 : vector<1x8x32xbf16> to vector<8x32xbf16>
    %cst_29 = arith.constant dense<0.000000e+00> : vector<8x32xf32>
    %110 = tpu.matmul %107, %109, %cst_29 {dimension_numbers = #tpu.dot_dimension_numbers<[1], [0], [0], [1], [0, 0, 1, 1], [], []>} : vector<8x8xbf16>, vector<8x32xbf16>, vector<8x32xf32> -> vector<8x32xf32>
    %111 = arith.addf %101, %110 : vector<8x32xf32>
    %112 = vector.extract_strided_slice %90 {offsets = [16, 0], sizes = [8, 8], strides = [1, 1]} : vector<64x8xf32> to vector<8x8xf32>
    %113 = arith.truncf %112 : vector<8x8xf32> to vector<8x8xbf16>
    %114 = vector.extract_strided_slice %39 {offsets = [0, 16], sizes = [8, 8], strides = [1, 1]} : vector<16x32xf32> to vector<8x8xf32>
    %115 = arith.truncf %114 : vector<8x8xf32> to vector<8x8xbf16>
    %cst_30 = arith.constant dense<0.000000e+00> : vector<8x8xf32>
    %116 = tpu.matmul %113, %115, %cst_30 {dimension_numbers = #tpu.dot_dimension_numbers<[1], [0], [0], [1], [0, 0, 1, 1], [], []>} : vector<8x8xbf16>, vector<8x8xbf16>, vector<8x8xf32> -> vector<8x8xf32>
    %117 = arith.truncf %116 : vector<8x8xf32> to vector<8x8xbf16>
    %c2 = arith.constant 2 : index
    %c0_31 = arith.constant 0 : index
    %c0_32 = arith.constant 0 : index
    %118 = vector.load %arg2[%c2, %c0_31, %c0_32] : memref<4x8x32xbf16, #tpu.memory_space<vmem>>, vector<1x8x32xbf16>
    %119 = vector.shape_cast %118 : vector<1x8x32xbf16> to vector<8x32xbf16>
    %cst_33 = arith.constant dense<0.000000e+00> : vector<8x32xf32>
    %120 = tpu.matmul %117, %119, %cst_33 {dimension_numbers = #tpu.dot_dimension_numbers<[1], [0], [0], [1], [0, 0, 1, 1], [], []>} : vector<8x8xbf16>, vector<8x32xbf16>, vector<8x32xf32> -> vector<8x32xf32>
    %121 = arith.addf %111, %120 : vector<8x32xf32>
    %122 = vector.extract_strided_slice %90 {offsets = [24, 0], sizes = [8, 8], strides = [1, 1]} : vector<64x8xf32> to vector<8x8xf32>
    %123 = arith.truncf %122 : vector<8x8xf32> to vector<8x8xbf16>
    %124 = vector.extract_strided_slice %39 {offsets = [0, 24], sizes = [8, 8], strides = [1, 1]} : vector<16x32xf32> to vector<8x8xf32>
    %125 = arith.truncf %124 : vector<8x8xf32> to vector<8x8xbf16>
    %cst_34 = arith.constant dense<0.000000e+00> : vector<8x8xf32>
    %126 = tpu.matmul %123, %125, %cst_34 {dimension_numbers = #tpu.dot_dimension_numbers<[1], [0], [0], [1], [0, 0, 1, 1], [], []>} : vector<8x8xbf16>, vector<8x8xbf16>, vector<8x8xf32> -> vector<8x8xf32>
    %127 = arith.truncf %126 : vector<8x8xf32> to vector<8x8xbf16>
    %c3 = arith.constant 3 : index
    %c0_35 = arith.constant 0 : index
    %c0_36 = arith.constant 0 : index
    %128 = vector.load %arg2[%c3, %c0_35, %c0_36] : memref<4x8x32xbf16, #tpu.memory_space<vmem>>, vector<1x8x32xbf16>
    %129 = vector.shape_cast %128 : vector<1x8x32xbf16> to vector<8x32xbf16>
    %cst_37 = arith.constant dense<0.000000e+00> : vector<8x32xf32>
    %130 = tpu.matmul %127, %129, %cst_37 {dimension_numbers = #tpu.dot_dimension_numbers<[1], [0], [0], [1], [0, 0, 1, 1], [], []>} : vector<8x8xbf16>, vector<8x32xbf16>, vector<8x32xf32> -> vector<8x32xf32>
    %131 = arith.addf %121, %130 : vector<8x32xf32>
    %cst_38 = arith.constant 0.000000e+00 : f32
    %132 = vector.broadcast %cst_38 : f32 to vector<8x32xf32>
    %133 = vector.extract_strided_slice %90 {offsets = [32, 0], sizes = [8, 8], strides = [1, 1]} : vector<64x8xf32> to vector<8x8xf32>
    %134 = arith.truncf %133 : vector<8x8xf32> to vector<8x8xbf16>
    %135 = vector.extract_strided_slice %39 {offsets = [8, 0], sizes = [8, 8], strides = [1, 1]} : vector<16x32xf32> to vector<8x8xf32>
    %136 = arith.truncf %135 : vector<8x8xf32> to vector<8x8xbf16>
    %cst_39 = arith.constant dense<0.000000e+00> : vector<8x8xf32>
    %137 = tpu.matmul %134, %136, %cst_39 {dimension_numbers = #tpu.dot_dimension_numbers<[1], [0], [0], [1], [0, 0, 1, 1], [], []>} : vector<8x8xbf16>, vector<8x8xbf16>, vector<8x8xf32> -> vector<8x8xf32>
    %138 = arith.truncf %137 : vector<8x8xf32> to vector<8x8xbf16>
    %c0_40 = arith.constant 0 : index
    %c0_41 = arith.constant 0 : index
    %c0_42 = arith.constant 0 : index
    %139 = vector.load %arg2[%c0_40, %c0_41, %c0_42] : memref<4x8x32xbf16, #tpu.memory_space<vmem>>, vector<1x8x32xbf16>
    %140 = vector.shape_cast %139 : vector<1x8x32xbf16> to vector<8x32xbf16>
    %cst_43 = arith.constant dense<0.000000e+00> : vector<8x32xf32>
    %141 = tpu.matmul %138, %140, %cst_43 {dimension_numbers = #tpu.dot_dimension_numbers<[1], [0], [0], [1], [0, 0, 1, 1], [], []>} : vector<8x8xbf16>, vector<8x32xbf16>, vector<8x32xf32> -> vector<8x32xf32>
    %142 = arith.addf %132, %141 : vector<8x32xf32>
    %143 = vector.extract_strided_slice %90 {offsets = [40, 0], sizes = [8, 8], strides = [1, 1]} : vector<64x8xf32> to vector<8x8xf32>
    %144 = arith.truncf %143 : vector<8x8xf32> to vector<8x8xbf16>
    %145 = vector.extract_strided_slice %39 {offsets = [8, 8], sizes = [8, 8], strides = [1, 1]} : vector<16x32xf32> to vector<8x8xf32>
    %146 = arith.truncf %145 : vector<8x8xf32> to vector<8x8xbf16>
    %cst_44 = arith.constant dense<0.000000e+00> : vector<8x8xf32>
    %147 = tpu.matmul %144, %146, %cst_44 {dimension_numbers = #tpu.dot_dimension_numbers<[1], [0], [0], [1], [0, 0, 1, 1], [], []>} : vector<8x8xbf16>, vector<8x8xbf16>, vector<8x8xf32> -> vector<8x8xf32>
    %148 = arith.truncf %147 : vector<8x8xf32> to vector<8x8xbf16>
    %c1_45 = arith.constant 1 : index
    %c0_46 = arith.constant 0 : index
    %c0_47 = arith.constant 0 : index
    %149 = vector.load %arg2[%c1_45, %c0_46, %c0_47] : memref<4x8x32xbf16, #tpu.memory_space<vmem>>, vector<1x8x32xbf16>
    %150 = vector.shape_cast %149 : vector<1x8x32xbf16> to vector<8x32xbf16>
    %cst_48 = arith.constant dense<0.000000e+00> : vector<8x32xf32>
    %151 = tpu.matmul %148, %150, %cst_48 {dimension_numbers = #tpu.dot_dimension_numbers<[1], [0], [0], [1], [0, 0, 1, 1], [], []>} : vector<8x8xbf16>, vector<8x32xbf16>, vector<8x32xf32> -> vector<8x32xf32>
    %152 = arith.addf %142, %151 : vector<8x32xf32>
    %153 = vector.extract_strided_slice %90 {offsets = [48, 0], sizes = [8, 8], strides = [1, 1]} : vector<64x8xf32> to vector<8x8xf32>
    %154 = arith.truncf %153 : vector<8x8xf32> to vector<8x8xbf16>
    %155 = vector.extract_strided_slice %39 {offsets = [8, 16], sizes = [8, 8], strides = [1, 1]} : vector<16x32xf32> to vector<8x8xf32>
    %156 = arith.truncf %155 : vector<8x8xf32> to vector<8x8xbf16>
    %cst_49 = arith.constant dense<0.000000e+00> : vector<8x8xf32>
    %157 = tpu.matmul %154, %156, %cst_49 {dimension_numbers = #tpu.dot_dimension_numbers<[1], [0], [0], [1], [0, 0, 1, 1], [], []>} : vector<8x8xbf16>, vector<8x8xbf16>, vector<8x8xf32> -> vector<8x8xf32>
    %158 = arith.truncf %157 : vector<8x8xf32> to vector<8x8xbf16>
    %c2_50 = arith.constant 2 : index
    %c0_51 = arith.constant 0 : index
    %c0_52 = arith.constant 0 : index
    %159 = vector.load %arg2[%c2_50, %c0_51, %c0_52] : memref<4x8x32xbf16, #tpu.memory_space<vmem>>, vector<1x8x32xbf16>
    %160 = vector.shape_cast %159 : vector<1x8x32xbf16> to vector<8x32xbf16>
    %cst_53 = arith.constant dense<0.000000e+00> : vector<8x32xf32>
    %161 = tpu.matmul %158, %160, %cst_53 {dimension_numbers = #tpu.dot_dimension_numbers<[1], [0], [0], [1], [0, 0, 1, 1], [], []>} : vector<8x8xbf16>, vector<8x32xbf16>, vector<8x32xf32> -> vector<8x32xf32>
    %162 = arith.addf %152, %161 : vector<8x32xf32>
    %163 = vector.extract_strided_slice %90 {offsets = [56, 0], sizes = [8, 8], strides = [1, 1]} : vector<64x8xf32> to vector<8x8xf32>
    %164 = arith.truncf %163 : vector<8x8xf32> to vector<8x8xbf16>
    %165 = vector.extract_strided_slice %39 {offsets = [8, 24], sizes = [8, 8], strides = [1, 1]} : vector<16x32xf32> to vector<8x8xf32>
    %166 = arith.truncf %165 : vector<8x8xf32> to vector<8x8xbf16>
    %cst_54 = arith.constant dense<0.000000e+00> : vector<8x8xf32>
    %167 = tpu.matmul %164, %166, %cst_54 {dimension_numbers = #tpu.dot_dimension_numbers<[1], [0], [0], [1], [0, 0, 1, 1], [], []>} : vector<8x8xbf16>, vector<8x8xbf16>, vector<8x8xf32> -> vector<8x8xf32>
    %168 = arith.truncf %167 : vector<8x8xf32> to vector<8x8xbf16>
    %c3_55 = arith.constant 3 : index
    %c0_56 = arith.constant 0 : index
    %c0_57 = arith.constant 0 : index
    %169 = vector.load %arg2[%c3_55, %c0_56, %c0_57] : memref<4x8x32xbf16, #tpu.memory_space<vmem>>, vector<1x8x32xbf16>
    %170 = vector.shape_cast %169 : vector<1x8x32xbf16> to vector<8x32xbf16>
    %cst_58 = arith.constant dense<0.000000e+00> : vector<8x32xf32>
    %171 = tpu.matmul %168, %170, %cst_58 {dimension_numbers = #tpu.dot_dimension_numbers<[1], [0], [0], [1], [0, 0, 1, 1], [], []>} : vector<8x8xbf16>, vector<8x32xbf16>, vector<8x32xf32> -> vector<8x32xf32>
    %172 = arith.addf %162, %171 : vector<8x32xf32>
    %173 = tpu.concatenate %131, %172 in 0 : vector<8x32xf32>, vector<8x32xf32> -> vector<16x32xf32>
    %174 = vector.broadcast %3 : vector<1x32xf32> to vector<16x32xf32>
    %175 = arith.addf %173, %174 : vector<16x32xf32>
    %176 = arith.addf %0, %175 : vector<16x32xf32>
    %cst_59 = arith.constant dense<0.000000e+00> : vector<16xf32>
    %177 = vector.multi_reduction <add>, %176, %cst_59 [1] : vector<16x32xf32> to vector<16xf32>
    %178 = vector.shape_cast %177 : vector<16xf32> to vector<16x1xf32>
    %cst_60 = arith.constant 3.200000e+01 : f32
    %179 = vector.broadcast %cst_60 : f32 to vector<16x1xf32>
    %180 = arith.divf %178, %179 : vector<16x1xf32>
    %181 = vector.broadcast %180 : vector<16x1xf32> to vector<16x32xf32>
    %182 = arith.subf %176, %181 : vector<16x32xf32>
    %183 = arith.mulf %182, %182 : vector<16x32xf32>
    %cst_61 = arith.constant dense<0.000000e+00> : vector<16xf32>
    %184 = vector.multi_reduction <add>, %183, %cst_61 [1] : vector<16x32xf32> to vector<16xf32>
    %185 = vector.shape_cast %184 : vector<16xf32> to vector<16x1xf32>
    %cst_62 = arith.constant 3.200000e+01 : f32
    %186 = vector.broadcast %cst_62 : f32 to vector<16x1xf32>
    %187 = arith.divf %185, %186 : vector<16x1xf32>
    %188 = vector.broadcast %180 : vector<16x1xf32> to vector<16x32xf32>
    %189 = arith.subf %176, %188 : vector<16x32xf32>
    %cst_63 = arith.constant 9.99999974E-6 : f32
    %190 = vector.broadcast %cst_63 : f32 to vector<16x1xf32>
    %191 = arith.addf %187, %190 : vector<16x1xf32>
    %192 = math.rsqrt %191 : vector<16x1xf32>
    %193 = vector.broadcast %192 : vector<16x1xf32> to vector<16x32xf32>
    %194 = arith.mulf %189, %193 : vector<16x32xf32>
    %195 = vector.broadcast %6 : vector<1x32xf32> to vector<16x32xf32>
    %196 = arith.mulf %194, %195 : vector<16x32xf32>
    %197 = vector.broadcast %7 : vector<1x32xf32> to vector<16x32xf32>
    %198 = arith.addf %196, %197 : vector<16x32xf32>
    %199 = arith.truncf %198 : vector<16x32xf32> to vector<16x32xbf16>
    %c0_64 = arith.constant 0 : index
    %c0_65 = arith.constant 0 : index
    %200 = vector.load %arg3[%c0_64, %c0_65] : memref<32x64xbf16, #tpu.memory_space<vmem>>, vector<32x64xbf16>
    %cst_66 = arith.constant dense<0.000000e+00> : vector<16x64xf32>
    %201 = tpu.matmul %199, %200, %cst_66 {dimension_numbers = #tpu.dot_dimension_numbers<[1], [0], [0], [1], [0, 0, 1, 1], [], []>} : vector<16x32xbf16>, vector<32x64xbf16>, vector<16x64xf32> -> vector<16x64xf32>
    %202 = vector.broadcast %8 : vector<1x64xf32> to vector<16x64xf32>
    %203 = arith.addf %201, %202 : vector<16x64xf32>
    %cst_67 = arith.constant 0.000000e+00 : f32
    %204 = vector.broadcast %cst_67 : f32 to vector<16x64xf32>
    %205 = arith.maximumf %203, %204 : vector<16x64xf32>
    %206 = arith.truncf %205 : vector<16x64xf32> to vector<16x64xbf16>
    %c0_68 = arith.constant 0 : index
    %c0_69 = arith.constant 0 : index
    %207 = vector.load %arg4[%c0_68, %c0_69] : memref<64x32xbf16, #tpu.memory_space<vmem>>, vector<64x32xbf16>
    %cst_70 = arith.constant dense<0.000000e+00> : vector<16x32xf32>
    %208 = tpu.matmul %206, %207, %cst_70 {dimension_numbers = #tpu.dot_dimension_numbers<[1], [0], [0], [1], [0, 0, 1, 1], [], []>} : vector<16x64xbf16>, vector<64x32xbf16>, vector<16x32xf32> -> vector<16x32xf32>
    %209 = vector.broadcast %9 : vector<1x32xf32> to vector<16x32xf32>
    %210 = arith.addf %208, %209 : vector<16x32xf32>
    %211 = arith.addf %176, %210 : vector<16x32xf32>
    %c0_71 = arith.constant 0 : index
    %c0_72 = arith.constant 0 : index
    %212 = vector.load %arg6[%c0_71, %c0_72] : memref<16x32xf32, #tpu.memory_space<vmem>>, vector<16x32xf32>
    tpu.vector_store %arg6[%c0_71, %c0_72], %211 {strides = array<i32>} : memref<16x32xf32, #tpu.memory_space<vmem>>, vector<16x32xf32>,
    return
  }
}

</mosaic_0001>

<llo_original>
// kernel: tpu_custom_call.1
$region0: #{tpu_custom_call.1}
  #allocation0 [shape = 'u32[]', space=smem, size = 0x4, offset = 0x4, fixed_abs, tag = 'smem constant byte address 0x4 - core index']
  #allocation1 [shape = 'u32[72,128]{1,0:T(1,128)}', space=vmem, size = 0x9000, scoped, tag = 'internal scratch']
  %s0 = inlined_call_operand.vmem [shape: f32[16,32], index: 0, kind: input, shape index: {}]
  %s1 = inlined_call_operand.vmem [shape: bf16[32,96], index: 1, kind: input, shape index: {}]
  %s2 = inlined_call_operand.vmem [shape: bf16[4,8,32], index: 2, kind: input, shape index: {}]
  %s3 = inlined_call_operand.hbm [shape: bf16[32,64], index: 3, kind: input, shape index: {}]
  %s4 = inlined_call_operand.vmem [shape: bf16[64,32], index: 4, kind: input, shape index: {}]
  %s5 = inlined_call_operand.hbm [shape: f32[8,128], index: 5, kind: input, shape index: {}]
  %s6 = inlined_call_operand.hbm [shape: f32[16,32], index: 6, kind: output, shape index: {}]
  %s7 = sld [smem:[#allocation0]]
  $region42: #{tpu_custom_call.1} parent=0
    _
  %s9 = ssub.s32 1, %s7
  %s10 = scalar_select 0, %s9, %s7
  $region1: #{tpu_custom_call.1} parent=0
    #allocation2 [shape = 'u8[8192]{0}', space=vmem, size = 0x2000, scoped, tag = 'input window, operand 3, single buffered']
    #allocation3 [shape = 's32[1]{0}', space=sflag, size = 0x4, scoped, tag = 'scoped memory for tpu_custom_call.1']
    #allocation4 [shape = 's32[1]{0}', space=sflag, size = 0x4, scoped, tag = 'scoped memory for tpu_custom_call.1']
    #allocation5 [shape = 'u8[4096]{0}', space=vmem, size = 0x1000, scoped, tag = 'input window, operand 5, single buffered']
    #allocation6 [shape = 's32[1]{0}', space=sflag, size = 0x4, scoped, tag = 'scoped memory for tpu_custom_call.1']
    #allocation7 [shape = 'u8[8192]{0}', space=vmem, size = 0x2000, scoped, tag = 'output window, operand 0, single buffered']
    %11 = vsyncpa [#allocation3], 0
    %12 = vsyncpa [#allocation6], 0
    %13 = vsyncpa [#allocation4], 0
    // Predicated region
    $region2: #{tpu_custom_call.1} parent=1 // pred_check
      _
    $region3: #{tpu_custom_call.1} parent=1 // pred_check_branch
      %15 = sbr.rel (0) target = $region5
    $region4: #{tpu_custom_call.1} parent=1 // pred_region
      _
    $region5: #{tpu_custom_call.1} parent=1 // pred_fallthru
      _
    // Predicated region
    $region6: #{tpu_custom_call.1} parent=1 // pred_check
      _
    $region7: #{tpu_custom_call.1} parent=1 // pred_check_branch
      %17 = sbr.rel (0) target = $region9
    $region8: #{tpu_custom_call.1} parent=1 // pred_region
      _
    $region9: #{tpu_custom_call.1} parent=1 // pred_fallthru
      _
    // Predicated region
    $region10: #{tpu_custom_call.1} parent=1 // pred_check
      _
    $region11: #{tpu_custom_call.1} parent=1 // pred_check_branch
      %19 = sbr.rel (0) target = $region13
    $region12: #{tpu_custom_call.1} parent=1 // pred_region
      _
    $region13: #{tpu_custom_call.1} parent=1 // pred_fallthru
      _
    // Predicated region
    $region14: #{tpu_custom_call.1} parent=1 // pred_check
      _
    $region15: #{tpu_custom_call.1} parent=1 // pred_check_branch
      %21 = sbr.rel (0) target = $region17
    $region16: #{tpu_custom_call.1} parent=1 // pred_region
      %23 = vsyncadd [#allocation3], 0
      %s24 = sshll.u32 %s3, 4
      %s25 = int_to_ptr.hbm [resolvable:$true] %s24
      %s26 = sshll.u32 [#allocation2], 4
      %s27 = int_to_ptr.vmem [resolvable:$true] %s26
      %32 = dma.hbm_to_vmem [thread:$0]  %s25, 256, %s27, [#allocation3], 64, 64, 4
    $region17: #{tpu_custom_call.1} parent=1 // pred_fallthru
      _
    // Predicated region
    $region18: #{tpu_custom_call.1} parent=1 // pred_check
      _
    $region19: #{tpu_custom_call.1} parent=1 // pred_check_branch
      %34 = sbr.rel (0) target = $region21
    $region20: #{tpu_custom_call.1} parent=1 // pred_region
      _
    $region21: #{tpu_custom_call.1} parent=1 // pred_fallthru
      _
    // Predicated region
    $region22: #{tpu_custom_call.1} parent=1 // pred_check
      _
    $region23: #{tpu_custom_call.1} parent=1 // pred_check_branch
      %36 = sbr.rel (0) target = $region25
    $region24: #{tpu_custom_call.1} parent=1 // pred_region
      %38 = vsyncadd [#allocation6], 0
      %s40 = sshll.u32 %s5, 4
      %s41 = int_to_ptr.hbm [resolvable:$true] %s40
      %s42 = sshll.u32 [#allocation5], 4
      %s43 = int_to_ptr.vmem [resolvable:$true] %s42
      %45 = dma.hbm_to_vmem [thread:$0]  %s41, 128, %s43, [#allocation6]
    $region25: #{tpu_custom_call.1} parent=1 // pred_fallthru
      _
    // Predicated region
    $region26: #{tpu_custom_call.1} parent=1 // pred_check
      _
    $region27: #{tpu_custom_call.1} parent=1 // pred_check_branch
      %47 = sbr.rel (0) target = $region29
    $region28: #{tpu_custom_call.1} parent=1 // pred_region
      %49 = dma.done [#allocation3], 256
    $region29: #{tpu_custom_call.1} parent=1 // pred_fallthru
      _
    // Predicated region
    $region30: #{tpu_custom_call.1} parent=1 // pred_check
      _
    $region31: #{tpu_custom_call.1} parent=1 // pred_check_branch
      %51 = sbr.rel (0) target = $region33
    $region32: #{tpu_custom_call.1} parent=1 // pred_region
      %53 = dma.done [#allocation6], 128
    $region33: #{tpu_custom_call.1} parent=1 // pred_fallthru
      _
    %v55 = vld [vmem:[%s0] sm:$0xff]
    %v56 = vld [vmem:[%s0 + $0x8] sm:$0xff]
    %v57 = vld [vmem:[#allocation5] sm:$0xff]
    %vm58 = vcmask 261120
    %v59 = vsel %vm58, %v55, 0.0
    %60 = vadd.xlane.f32.xlu0 %v59
    %v61 = vpop.xlane.xlu0 %60
    %v62 = vsel %vm58, %v56, 0.0
    %63 = vadd.xlane.f32.xlu0 %v62
    %v64 = vpop.xlane.xlu0 %63
    %v65 = vrcp.pop 32.0
    %v66 = vmul.f32 32.0, %v65
    %v67 = vsub.f32 1.0, %v66
    %v68 = vmul.f32 %v65, %v67
    %v69 = vadd.f32 %v65, %v68
    %vm70 = vweird.f32 %v65
    %v71 = vsel %vm70, %v65, %v69
    %v72 = vmul.f32 %v61, %v71
    %v73 = vmul.f32 %v64, %v71
    %v74 = vsub.f32 %v55, %v72
    %v75 = vsub.f32 %v56, %v73
    %v76 = vmul.f32 %v74, %v74
    %v77 = vmul.f32 %v75, %v75
    %v78 = vsel %vm58, %v76, 0.0
    %79 = vadd.xlane.f32.xlu0 %v78
    %v80 = vpop.xlane.xlu0 %79
    %v81 = vsel %vm58, %v77, 0.0
    %82 = vadd.xlane.f32.xlu0 %v81
    %v83 = vpop.xlane.xlu0 %82
    %v84 = vmul.f32 %v80, %v71
    %v85 = vmul.f32 %v83, %v71
    %v86 = vadd.f32 %v84, 1e-05
    %v87 = vadd.f32 %v85, 1e-05
    %v88 = vrsqrt.pop %v86
    %v89 = vmul.f32 %v88, %v86
    %v90 = vmul.f32 %v89, %v88
    %v91 = vmul.f32 0.5, %v90
    %v92 = vsub.f32 1.5, %v91
    %v93 = vmul.f32 %v88, %v92
    %vm94 = vweird.f32 %v86
    %vm95 = vweird.f32 %v88
    %vm96 = vmor %vm94, %vm95
    %v97 = vsel %vm96, %v88, %v93
    %v98 = vrsqrt.pop %v87
    %v99 = vmul.f32 %v98, %v87
    %v100 = vmul.f32 %v99, %v98
    %v101 = vmul.f32 0.5, %v100
    %v102 = vsub.f32 1.5, %v101
    %v103 = vmul.f32 %v98, %v102
    %vm104 = vweird.f32 %v87
    %vm105 = vweird.f32 %v98
    %vm106 = vmor %vm104, %vm105
    %v107 = vsel %vm106, %v98, %v103
    %v108 = vmul.f32 %v74, %v97
    %v109 = vmul.f32 %v75, %v107
    %v110 = vperm.slane %v57, 2
    %v111 = vmul.f32 %v108, %v110
    %v112 = vmul.f32 %v109, %v110
    %v113 = vperm.slane %v57, 3
    %v114 = vadd.f32 %v111, %v113
    %v115 = vadd.f32 %v112, %v113
    %v116 = vpack.c.bf16 %v115, %v114
    %v117 = vld [vmem:[%s1] sm:$0xf]
    %v118 = vld [vmem:[%s1 + $0x4] sm:$0xf]
    %v119 = vld [vmem:[%s1 + $0x8] sm:$0xf]
    %v120 = vld [vmem:[%s1 + $0xc] sm:$0xf]
    %v121 = vperm.slane %v57, 0
    %v126 = vunpack.c.l.b16 %v117
    %v127 = vunpack.c.l.b16 %v118
    %v128 = vunpack.c.l.b16 %v119
    %v129 = vunpack.c.l.b16 %v120
    %v130 = vpack.c.b16 %v127, %v126
    %v131 = vpack.c.b16 %v129, %v128
    %v135 = vsel %vm58, %v116, 0
    %137 = vmatpush.bf16.msra.mxu0 0
    %138 = vmatpush.bf16.msra.mxu0 0
    %139 = vmatpush.bf16.msra.mxu0 0
    %140 = vmatpush.bf16.msra.mxu0 0
    %141 = vmatpush.bf16.msra.mxu0 0
    %142 = vmatpush.bf16.msra.mxu0 0
    %143 = vmatpush.bf16.msra.mxu0 %v131
    %144 = vmatpush.bf16.msra.mxu0 %v130
    %145 = vmatmul.bf16.gmra.mxu0 %v135
    %v146 = vpop.f32.mrf.mxu0
    %v147 = vadd.f32 %v121, %v146
    %v148 = vpop.f32.mrf.mxu0
    %v149 = vadd.f32 %v121, %v148
    %150 = vdwg.mxu0
    %v151 = vpack.c.bf16 %v147, %v147
    %153 = vrot.lane.b32.xlu0 %v151, 96
    %v154 = vpop.permute.xlu0 %153
    %vm155 = vcmask 64512
    %v157 = vsel %vm155, %v151, 0
    %v160 = vsel %vm155, %v154, 0
    %162 = vmatpush.bf16.xpose.msra.mxu0 0
    %163 = vmatpush.bf16.xpose.msra.mxu0 0
    %164 = vmatpush.bf16.xpose.msra.mxu0 0
    %165 = vmatpush.bf16.xpose.msra.mxu0 0
    %166 = vmatpush.bf16.xpose.msra.mxu0 0
    %167 = vmatpush.bf16.xpose.msra.mxu0 0
    %168 = vmatpush.bf16.xpose.msra.mxu0 0
    %169 = vmatpush.bf16.xpose.msra.mxu0 %v160
    %170 = vmatmul.bf16.gmra.mxu0 %v157
    %v171 = vpop.f32.mrf.mxu0
    %v172 = vadd.f32 0.0, %v171
    %v173 = vpop.f32.mrf.mxu0
    %174 = vdwg.mxu0
    %175 = vrot.lane.b32.xlu0 %v151, 120
    %v176 = vpop.permute.xlu0 %175
    %177 = vrot.lane.b32.xlu0 %v151, 88
    %v178 = vpop.permute.xlu0 %177
    %v180 = vsel %vm155, %v176, 0
    %v183 = vsel %vm155, %v178, 0
    %185 = vmatpush.bf16.xpose.msra.mxu0 0
    %186 = vmatpush.bf16.xpose.msra.mxu0 0
    %187 = vmatpush.bf16.xpose.msra.mxu0 0
    %188 = vmatpush.bf16.xpose.msra.mxu0 0
    %189 = vmatpush.bf16.xpose.msra.mxu0 0
    %190 = vmatpush.bf16.xpose.msra.mxu0 0
    %191 = vmatpush.bf16.xpose.msra.mxu0 0
    %192 = vmatpush.bf16.xpose.msra.mxu0 %v183
    %193 = vmatmul.bf16.gmra.mxu0 %v180
    %v194 = vpop.f32.mrf.mxu0
    %v195 = vadd.f32 0.0, %v194
    %v196 = vpop.f32.mrf.mxu0
    %197 = vdwg.mxu0
    %198 = vrot.lane.b32.xlu0 %v151, 112
    %v199 = vpop.permute.xlu0 %198
    %200 = vrot.lane.b32.xlu0 %v151, 80
    %v201 = vpop.permute.xlu0 %200
    %v203 = vsel %vm155, %v199, 0
    %v206 = vsel %vm155, %v201, 0
    %208 = vmatpush.bf16.xpose.msra.mxu0 0
    %209 = vmatpush.bf16.xpose.msra.mxu0 0
    %210 = vmatpush.bf16.xpose.msra.mxu0 0
    %211 = vmatpush.bf16.xpose.msra.mxu0 0
    %212 = vmatpush.bf16.xpose.msra.mxu0 0
    %213 = vmatpush.bf16.xpose.msra.mxu0 0
    %214 = vmatpush.bf16.xpose.msra.mxu0 0
    %215 = vmatpush.bf16.xpose.msra.mxu0 %v206
    %216 = vmatmul.bf16.gmra.mxu0 %v203
    %v217 = vpop.f32.mrf.mxu0
    %v218 = vadd.f32 0.0, %v217
    %v219 = vpop.f32.mrf.mxu0
    %220 = vdwg.mxu0
    %221 = vrot.lane.b32.xlu0 %v151, 104
    %v222 = vpop.permute.xlu0 %221
    %223 = vrot.lane.b32.xlu0 %v151, 72
    %v224 = vpop.permute.xlu0 %223
    %v226 = vsel %vm155, %v222, 0
    %v229 = vsel %vm155, %v224, 0
    %231 = vmatpush.bf16.xpose.msra.mxu0 0
    %232 = vmatpush.bf16.xpose.msra.mxu0 0
    %233 = vmatpush.bf16.xpose.msra.mxu0 0
    %234 = vmatpush.bf16.xpose.msra.mxu0 0
    %235 = vmatpush.bf16.xpose.msra.mxu0 0
    %236 = vmatpush.bf16.xpose.msra.mxu0 0
    %237 = vmatpush.bf16.xpose.msra.mxu0 0
    %238 = vmatpush.bf16.xpose.msra.mxu0 %v229
    %239 = vmatmul.bf16.gmra.mxu0 %v226
    %v240 = vpop.f32.mrf.mxu0
    %v241 = vadd.f32 0.0, %v240
    %v242 = vpop.f32.mrf.mxu0
    %243 = vdwg.mxu0
    %v244 = vpack.c.bf16 %v149, %v149
    %246 = vrot.lane.b32.xlu0 %v244, 96
    %v247 = vpop.permute.xlu0 %246
    %v249 = vsel %vm155, %v244, 0
    %v252 = vsel %vm155, %v247, 0
    %254 = vmatpush.bf16.xpose.msra.mxu0 0
    %255 = vmatpush.bf16.xpose.msra.mxu0 0
    %256 = vmatpush.bf16.xpose.msra.mxu0 0
    %257 = vmatpush.bf16.xpose.msra.mxu0 0
    %258 = vmatpush.bf16.xpose.msra.mxu0 0
    %259 = vmatpush.bf16.xpose.msra.mxu0 0
    %260 = vmatpush.bf16.xpose.msra.mxu0 0
    %261 = vmatpush.bf16.xpose.msra.mxu0 %v252
    %262 = vmatmul.bf16.gmra.mxu0 %v249
    %v263 = vpop.f32.mrf.mxu0
    %v264 = vadd.f32 0.0, %v263
    %v265 = vpop.f32.mrf.mxu0
    %266 = vdwg.mxu0
    %267 = vrot.lane.b32.xlu0 %v244, 120
    %v268 = vpop.permute.xlu0 %267
    %269 = vrot.lane.b32.xlu0 %v244, 88
    %v270 = vpop.permute.xlu0 %269
    %v272 = vsel %vm155, %v268, 0
    %v275 = vsel %vm155, %v270, 0
    %277 = vmatpush.bf16.xpose.msra.mxu0 0
    %278 = vmatpush.bf16.xpose.msra.mxu0 0
    %279 = vmatpush.bf16.xpose.msra.mxu0 0
    %280 = vmatpush.bf16.xpose.msra.mxu0 0
    %281 = vmatpush.bf16.xpose.msra.mxu0 0
    %282 = vmatpush.bf16.xpose.msra.mxu0 0
    %283 = vmatpush.bf16.xpose.msra.mxu0 0
    %284 = vmatpush.bf16.xpose.msra.mxu0 %v275
    %285 = vmatmul.bf16.gmra.mxu0 %v272
    %v286 = vpop.f32.mrf.mxu0
    %v287 = vadd.f32 0.0, %v286
    %v288 = vpop.f32.mrf.mxu0
    %289 = vdwg.mxu0
    %290 = vrot.lane.b32.xlu0 %v244, 112
    %v291 = vpop.permute.xlu0 %290
    %292 = vrot.lane.b32.xlu0 %v244, 80
    %v293 = vpop.permute.xlu0 %292
    %v295 = vsel %vm155, %v291, 0
    %v298 = vsel %vm155, %v293, 0
    %300 = vmatpush.bf16.xpose.msra.mxu0 0
    %301 = vmatpush.bf16.xpose.msra.mxu0 0
    %302 = vmatpush.bf16.xpose.msra.mxu0 0
    %303 = vmatpush.bf16.xpose.msra.mxu0 0
    %304 = vmatpush.bf16.xpose.msra.mxu0 0
    %305 = vmatpush.bf16.xpose.msra.mxu0 0
    %306 = vmatpush.bf16.xpose.msra.mxu0 0
    %307 = vmatpush.bf16.xpose.msra.mxu0 %v298
    %308 = vmatmul.bf16.gmra.mxu0 %v295
    %v309 = vpop.f32.mrf.mxu0
    %v310 = vadd.f32 0.0, %v309
    %v311 = vpop.f32.mrf.mxu0
    %312 = vdwg.mxu0
    %313 = vrot.lane.b32.xlu0 %v244, 104
    %v314 = vpop.permute.xlu0 %313
    %315 = vrot.lane.b32.xlu0 %v244, 72
    %v316 = vpop.permute.xlu0 %315
    %v318 = vsel %vm155, %v314, 0
    %v321 = vsel %vm155, %v316, 0
    %323 = vmatpush.bf16.xpose.msra.mxu0 0
    %324 = vmatpush.bf16.xpose.msra.mxu0 0
    %325 = vmatpush.bf16.xpose.msra.mxu0 0
    %326 = vmatpush.bf16.xpose.msra.mxu0 0
    %327 = vmatpush.bf16.xpose.msra.mxu0 0
    %328 = vmatpush.bf16.xpose.msra.mxu0 0
    %329 = vmatpush.bf16.xpose.msra.mxu0 0
    %330 = vmatpush.bf16.xpose.msra.mxu0 %v321
    %331 = vmatmul.bf16.gmra.mxu0 %v318
    %v332 = vpop.f32.mrf.mxu0
    %v333 = vadd.f32 0.0, %v332
    %v334 = vpop.f32.mrf.mxu0
    %335 = vdwg.mxu0
    %v336 = vsel %vm155, %v172, -inf
    %337 = vmax.xlane.f32.xlu0 %v336
    %v338 = vpop.xlane.xlu0 %337
    %v339 = vsel %vm155, %v195, -inf
    %340 = vmax.xlane.f32.xlu0 %v339
    %v341 = vpop.xlane.xlu0 %340
    %v342 = vsel %vm155, %v218, -inf
    %343 = vmax.xlane.f32.xlu0 %v342
    %v344 = vpop.xlane.xlu0 %343
    %v345 = vsel %vm155, %v241, -inf
    %346 = vmax.xlane.f32.xlu0 %v345
    %v347 = vpop.xlane.xlu0 %346
    %v348 = vsel %vm155, %v264, -inf
    %349 = vmax.xlane.f32.xlu0 %v348
    %v350 = vpop.xlane.xlu0 %349
    %v351 = vsel %vm155, %v287, -inf
    %352 = vmax.xlane.f32.xlu0 %v351
    %v353 = vpop.xlane.xlu0 %352
    %v354 = vsel %vm155, %v310, -inf
    %355 = vmax.xlane.f32.xlu0 %v354
    %v356 = vpop.xlane.xlu0 %355
    %v357 = vsel %vm155, %v333, -inf
    %358 = vmax.xlane.f32.xlu0 %v357
    %v359 = vpop.xlane.xlu0 %358
    %v360 = vsub.f32 %v172, %v338
    %v361 = vsub.f32 %v195, %v341
    %v362 = vsub.f32 %v218, %v344
    %v363 = vsub.f32 %v241, %v347
    %v364 = vsub.f32 %v264, %v350
    %v365 = vsub.f32 %v287, %v353
    %v366 = vsub.f32 %v310, %v356
    %v367 = vsub.f32 %v333, %v359
    %v368 = vmul.f32 %v360, 1.442695
    %v369 = vpow.pop %v368
    %v370 = vmul.f32 %v361, 1.442695
    %v371 = vpow.pop %v370
    %v372 = vmul.f32 %v362, 1.442695
    %v373 = vpow.pop %v372
    %v374 = vmul.f32 %v363, 1.442695
    %v375 = vpow.pop %v374
    %v376 = vmul.f32 %v364, 1.442695
    %v377 = vpow.pop %v376
    %v378 = vmul.f32 %v365, 1.442695
    %v379 = vpow.pop %v378
    %v380 = vmul.f32 %v366, 1.442695
    %v381 = vpow.pop %v380
    %v382 = vmul.f32 %v367, 1.442695
    %v383 = vpow.pop %v382
    %v384 = vsel %vm155, %v369, 0.0
    %385 = vadd.xlane.f32.xlu0 %v384
    %v386 = vpop.xlane.xlu0 %385
    %v387 = vsel %vm155, %v371, 0.0
    %388 = vadd.xlane.f32.xlu0 %v387
    %v389 = vpop.xlane.xlu0 %388
    %v390 = vsel %vm155, %v373, 0.0
    %391 = vadd.xlane.f32.xlu0 %v390
    %v392 = vpop.xlane.xlu0 %391
    %v393 = vsel %vm155, %v375, 0.0
    %394 = vadd.xlane.f32.xlu0 %v393
    %v395 = vpop.xlane.xlu0 %394
    %v396 = vsel %vm155, %v377, 0.0
    %397 = vadd.xlane.f32.xlu0 %v396
    %v398 = vpop.xlane.xlu0 %397
    %v399 = vsel %vm155, %v379, 0.0
    %400 = vadd.xlane.f32.xlu0 %v399
    %v401 = vpop.xlane.xlu0 %400
    %v402 = vsel %vm155, %v381, 0.0
    %403 = vadd.xlane.f32.xlu0 %v402
    %v404 = vpop.xlane.xlu0 %403
    %v405 = vsel %vm155, %v383, 0.0
    %406 = vadd.xlane.f32.xlu0 %v405
    %v407 = vpop.xlane.xlu0 %406
    %v408 = vrcp.pop %v386
    %v409 = vrcp.pop %v389
    %v410 = vrcp.pop %v392
    %v411 = vrcp.pop %v395
    %v412 = vrcp.pop %v398
    %v413 = vrcp.pop %v401
    %v414 = vrcp.pop %v404
    %v415 = vrcp.pop %v407
    %v416 = vmul.f32 %v369, %v408
    %v417 = vmul.f32 %v371, %v409
    %v418 = vmul.f32 %v373, %v410
    %v419 = vmul.f32 %v375, %v411
    %v420 = vmul.f32 %v377, %v412
    %v421 = vmul.f32 %v379, %v413
    %v422 = vmul.f32 %v381, %v414
    %v423 = vmul.f32 %v383, %v415
    %v424 = vpack.c.bf16 %v416, %v416
    %425 = vrot.lane.b32.xlu0 %v151, 64
    %v426 = vpop.permute.xlu0 %425
    %v428 = vsel %vm155, %v424, 0
    %vm430 = vcmask 1043456
    %v432 = vsel %vm430, %v426, 0
    %434 = vmatpush.bf16.msra.mxu0 0
    %435 = vmatpush.bf16.msra.mxu0 0
    %436 = vmatpush.bf16.msra.mxu0 0
    %437 = vmatpush.bf16.msra.mxu0 0
    %438 = vmatpush.bf16.msra.mxu0 0
    %439 = vmatpush.bf16.msra.mxu0 0
    %440 = vmatpush.bf16.msra.mxu0 0
    %441 = vmatpush.bf16.msra.mxu0 %v432
    %442 = vmatmul.bf16.gmra.mxu0 %v428
    %v443 = vpop.f32.mrf.mxu0
    %v444 = vadd.f32 0.0, %v443
    %v445 = vpop.f32.mrf.mxu0
    %446 = vdwg.mxu0
    %v447 = vpack.c.bf16 %v444, %v444
    %v448 = vld [vmem:[%s2] sm:$0xf]
    %v449 = vpack.c.bf16 %v417, %v417
    %450 = vrot.lane.b32.xlu0 %v151, 56
    %v451 = vpop.permute.xlu0 %450
    %v453 = vsel %vm155, %v449, 0
    %v456 = vsel %vm430, %v451, 0
    %458 = vmatpush.bf16.msra.mxu0 0
    %459 = vmatpush.bf16.msra.mxu0 0
    %460 = vmatpush.bf16.msra.mxu0 0
    %461 = vmatpush.bf16.msra.mxu0 0
    %462 = vmatpush.bf16.msra.mxu0 0
    %463 = vmatpush.bf16.msra.mxu0 0
    %464 = vmatpush.bf16.msra.mxu0 0
    %465 = vmatpush.bf16.msra.mxu0 %v456
    %466 = vmatmul.bf16.gmra.mxu0 %v453
    %v467 = vpop.f32.mrf.mxu0
    %v468 = vadd.f32 0.0, %v467
    %v469 = vpop.f32.mrf.mxu0
    %470 = vdwg.mxu0
    %v471 = vpack.c.bf16 %v468, %v468
    %s472 = scalar_lea.vmem %s2, 4
    %v473 = vld [vmem:[%s472] sm:$0xf]
    %v475 = vsel %vm155, %v471, 0
    %v478 = vsel %vm430, %v473, 0
    %480 = vmatpush.bf16.msra.mxu0 0
    %481 = vmatpush.bf16.msra.mxu0 0
    %482 = vmatpush.bf16.msra.mxu0 0
    %483 = vmatpush.bf16.msra.mxu0 0
    %484 = vmatpush.bf16.msra.mxu0 0
    %485 = vmatpush.bf16.msra.mxu0 0
    %486 = vmatpush.bf16.msra.mxu0 0
    %487 = vmatpush.bf16.msra.mxu0 %v478
    %488 = vmatmul.bf16.gmra.mxu0 %v475
    %v489 = vpop.f32.mrf.mxu0
    %v490 = vadd.f32 0.0, %v489
    %v491 = vpop.f32.mrf.mxu0
    %492 = vdwg.mxu0
    %v494 = vsel %vm155, %v447, 0
    %v497 = vsel %vm430, %v448, 0
    %499 = vmatpush.bf16.msra.mxu0 0
    %500 = vmatpush.bf16.msra.mxu0 0
    %501 = vmatpush.bf16.msra.mxu0 0
    %502 = vmatpush.bf16.msra.mxu0 0
    %503 = vmatpush.bf16.msra.mxu0 0
    %504 = vmatpush.bf16.msra.mxu0 0
    %505 = vmatpush.bf16.msra.mxu0 0
    %506 = vmatpush.bf16.msra.mxu0 %v497
    %507 = vmatmul.bf16.gmra.mxu0 %v494
    %v508 = vpop.f32.mrf.mxu0
    %v509 = vadd.f32 %v490, %v508
    %v510 = vpop.f32.mrf.mxu0
    %511 = vdwg.mxu0
    %v512 = vpack.c.bf16 %v418, %v418
    %513 = vrot.lane.b32.xlu0 %v151, 48
    %v514 = vpop.permute.xlu0 %513
    %v516 = vsel %vm155, %v512, 0
    %v519 = vsel %vm430, %v514, 0
    %521 = vmatpush.bf16.msra.mxu0 0
    %522 = vmatpush.bf16.msra.mxu0 0
    %523 = vmatpush.bf16.msra.mxu0 0
    %524 = vmatpush.bf16.msra.mxu0 0
    %525 = vmatpush.bf16.msra.mxu0 0
    %526 = vmatpush.bf16.msra.mxu0 0
    %527 = vmatpush.bf16.msra.mxu0 0
    %528 = vmatpush.bf16.msra.mxu0 %v519
    %529 = vmatmul.bf16.gmra.mxu0 %v516
    %v530 = vpop.f32.mrf.mxu0
    %v531 = vadd.f32 0.0, %v530
    %v532 = vpop.f32.mrf.mxu0
    %533 = vdwg.mxu0
    %v534 = vpack.c.bf16 %v531, %v531
    %s535 = scalar_lea.vmem %s2, 8
    %v536 = vld [vmem:[%s535] sm:$0xf]
    %v538 = vsel %vm155, %v534, 0
    %v541 = vsel %vm430, %v536, 0
    %543 = vmatpush.bf16.msra.mxu0 0
    %544 = vmatpush.bf16.msra.mxu0 0
    %545 = vmatpush.bf16.msra.mxu0 0
    %546 = vmatpush.bf16.msra.mxu0 0
    %547 = vmatpush.bf16.msra.mxu0 0
    %548 = vmatpush.bf16.msra.mxu0 0
    %549 = vmatpush.bf16.msra.mxu0 0
    %550 = vmatpush.bf16.msra.mxu0 %v541
    %551 = vmatmul.bf16.gmra.mxu0 %v538
    %v552 = vpop.f32.mrf.mxu0
    %v553 = vadd.f32 0.0, %v552
    %v554 = vpop.f32.mrf.mxu0
    %555 = vdwg.mxu0
    %v556 = vadd.f32 %v509, %v553
    %v557 = vpack.c.bf16 %v419, %v419
    %558 = vrot.lane.b32.xlu0 %v151, 40
    %v559 = vpop.permute.xlu0 %558
    %v561 = vsel %vm155, %v557, 0
    %v564 = vsel %vm430, %v559, 0
    %566 = vmatpush.bf16.msra.mxu0 0
    %567 = vmatpush.bf16.msra.mxu0 0
    %568 = vmatpush.bf16.msra.mxu0 0
    %569 = vmatpush.bf16.msra.mxu0 0
    %570 = vmatpush.bf16.msra.mxu0 0
    %571 = vmatpush.bf16.msra.mxu0 0
    %572 = vmatpush.bf16.msra.mxu0 0
    %573 = vmatpush.bf16.msra.mxu0 %v564
    %574 = vmatmul.bf16.gmra.mxu0 %v561
    %v575 = vpop.f32.mrf.mxu0
    %v576 = vadd.f32 0.0, %v575
    %v577 = vpop.f32.mrf.mxu0
    %578 = vdwg.mxu0
    %v579 = vpack.c.bf16 %v576, %v576
    %s580 = scalar_lea.vmem %s2, 12
    %v581 = vld [vmem:[%s580] sm:$0xf]
    %v583 = vsel %vm155, %v579, 0
    %v586 = vsel %vm430, %v581, 0
    %588 = vmatpush.bf16.msra.mxu0 0
    %589 = vmatpush.bf16.msra.mxu0 0
    %590 = vmatpush.bf16.msra.mxu0 0
    %591 = vmatpush.bf16.msra.mxu0 0
    %592 = vmatpush.bf16.msra.mxu0 0
    %593 = vmatpush.bf16.msra.mxu0 0
    %594 = vmatpush.bf16.msra.mxu0 0
    %595 = vmatpush.bf16.msra.mxu0 %v586
    %596 = vmatmul.bf16.gmra.mxu0 %v583
    %v597 = vpop.f32.mrf.mxu0
    %v598 = vadd.f32 0.0, %v597
    %v599 = vpop.f32.mrf.mxu0
    %600 = vdwg.mxu0
    %v601 = vadd.f32 %v556, %v598
    %v602 = vpack.c.bf16 %v420, %v420
    %603 = vrot.lane.b32.xlu0 %v244, 64
    %v604 = vpop.permute.xlu0 %603
    %v606 = vsel %vm155, %v602, 0
    %v609 = vsel %vm430, %v604, 0
    %611 = vmatpush.bf16.msra.mxu0 0
    %612 = vmatpush.bf16.msra.mxu0 0
    %613 = vmatpush.bf16.msra.mxu0 0
    %614 = vmatpush.bf16.msra.mxu0 0
    %615 = vmatpush.bf16.msra.mxu0 0
    %616 = vmatpush.bf16.msra.mxu0 0
    %617 = vmatpush.bf16.msra.mxu0 0
    %618 = vmatpush.bf16.msra.mxu0 %v609
    %619 = vmatmul.bf16.gmra.mxu0 %v606
    %v620 = vpop.f32.mrf.mxu0
    %v621 = vadd.f32 0.0, %v620
    %v622 = vpop.f32.mrf.mxu0
    %623 = vdwg.mxu0
    %v624 = vpack.c.bf16 %v621, %v621
    %v625 = vpack.c.bf16 %v421, %v421
    %626 = vrot.lane.b32.xlu0 %v244, 56
    %v627 = vpop.permute.xlu0 %626
    %v629 = vsel %vm155, %v625, 0
    %v632 = vsel %vm430, %v627, 0
    %634 = vmatpush.bf16.msra.mxu0 0
    %635 = vmatpush.bf16.msra.mxu0 0
    %636 = vmatpush.bf16.msra.mxu0 0
    %637 = vmatpush.bf16.msra.mxu0 0
    %638 = vmatpush.bf16.msra.mxu0 0
    %639 = vmatpush.bf16.msra.mxu0 0
    %640 = vmatpush.bf16.msra.mxu0 0
    %641 = vmatpush.bf16.msra.mxu0 %v632
    %642 = vmatmul.bf16.gmra.mxu0 %v629
    %v643 = vpop.f32.mrf.mxu0
    %v644 = vadd.f32 0.0, %v643
    %v645 = vpop.f32.mrf.mxu0
    %646 = vdwg.mxu0
    %v647 = vpack.c.bf16 %v644, %v644
    %v649 = vsel %vm155, %v647, 0
    %651 = vmatpush.bf16.msra.mxu0 0
    %652 = vmatpush.bf16.msra.mxu0 0
    %653 = vmatpush.bf16.msra.mxu0 0
    %654 = vmatpush.bf16.msra.mxu0 0
    %655 = vmatpush.bf16.msra.mxu0 0
    %656 = vmatpush.bf16.msra.mxu0 0
    %657 = vmatpush.bf16.msra.mxu0 0
    %658 = vmatpush.bf16.msra.mxu0 %v478
    %659 = vmatmul.bf16.gmra.mxu0 %v649
    %v660 = vpop.f32.mrf.mxu0
    %v661 = vadd.f32 0.0, %v660
    %v662 = vpop.f32.mrf.mxu0
    %663 = vdwg.mxu0
    %v665 = vsel %vm155, %v624, 0
    %667 = vmatpush.bf16.msra.mxu0 0
    %668 = vmatpush.bf16.msra.mxu0 0
    %669 = vmatpush.bf16.msra.mxu0 0
    %670 = vmatpush.bf16.msra.mxu0 0
    %671 = vmatpush.bf16.msra.mxu0 0
    %672 = vmatpush.bf16.msra.mxu0 0
    %673 = vmatpush.bf16.msra.mxu0 0
    %674 = vmatpush.bf16.msra.mxu0 %v497
    %675 = vmatmul.bf16.gmra.mxu0 %v665
    %v676 = vpop.f32.mrf.mxu0
    %v677 = vadd.f32 %v661, %v676
    %v678 = vpop.f32.mrf.mxu0
    %679 = vdwg.mxu0
    %v680 = vpack.c.bf16 %v422, %v422
    %681 = vrot.lane.b32.xlu0 %v244, 48
    %v682 = vpop.permute.xlu0 %681
    %v684 = vsel %vm155, %v680, 0
    %v687 = vsel %vm430, %v682, 0
    %689 = vmatpush.bf16.msra.mxu0 0
    %690 = vmatpush.bf16.msra.mxu0 0
    %691 = vmatpush.bf16.msra.mxu0 0
    %692 = vmatpush.bf16.msra.mxu0 0
    %693 = vmatpush.bf16.msra.mxu0 0
    %694 = vmatpush.bf16.msra.mxu0 0
    %695 = vmatpush.bf16.msra.mxu0 0
    %696 = vmatpush.bf16.msra.mxu0 %v687
    %697 = vmatmul.bf16.gmra.mxu0 %v684
    %v698 = vpop.f32.mrf.mxu0
    %v699 = vadd.f32 0.0, %v698
    %v700 = vpop.f32.mrf.mxu0
    %701 = vdwg.mxu0
    %v702 = vpack.c.bf16 %v699, %v699
    %v704 = vsel %vm155, %v702, 0
    %706 = vmatpush.bf16.msra.mxu0 0
    %707 = vmatpush.bf16.msra.mxu0 0
    %708 = vmatpush.bf16.msra.mxu0 0
    %709 = vmatpush.bf16.msra.mxu0 0
    %710 = vmatpush.bf16.msra.mxu0 0
    %711 = vmatpush.bf16.msra.mxu0 0
    %712 = vmatpush.bf16.msra.mxu0 0
    %713 = vmatpush.bf16.msra.mxu0 %v541
    %714 = vmatmul.bf16.gmra.mxu0 %v704
    %v715 = vpop.f32.mrf.mxu0
    %v716 = vadd.f32 0.0, %v715
    %v717 = vpop.f32.mrf.mxu0
    %718 = vdwg.mxu0
    %v719 = vadd.f32 %v677, %v716
    %v720 = vpack.c.bf16 %v423, %v423
    %721 = vrot.lane.b32.xlu0 %v244, 40
    %v722 = vpop.permute.xlu0 %721
    %v724 = vsel %vm155, %v720, 0
    %v727 = vsel %vm430, %v722, 0
    %729 = vmatpush.bf16.msra.mxu0 0
    %730 = vmatpush.bf16.msra.mxu0 0
    %731 = vmatpush.bf16.msra.mxu0 0
    %732 = vmatpush.bf16.msra.mxu0 0
    %733 = vmatpush.bf16.msra.mxu0 0
    %734 = vmatpush.bf16.msra.mxu0 0
    %735 = vmatpush.bf16.msra.mxu0 0
    %736 = vmatpush.bf16.msra.mxu0 %v727
    %737 = vmatmul.bf16.gmra.mxu0 %v724
    %v738 = vpop.f32.mrf.mxu0
    %v739 = vadd.f32 0.0, %v738
    %v740 = vpop.f32.mrf.mxu0
    %741 = vdwg.mxu0
    %v742 = vpack.c.bf16 %v739, %v739
    %v744 = vsel %vm155, %v742, 0
    %746 = vmatpush.bf16.msra.mxu0 0
    %747 = vmatpush.bf16.msra.mxu0 0
    %748 = vmatpush.bf16.msra.mxu0 0
    %749 = vmatpush.bf16.msra.mxu0 0
    %750 = vmatpush.bf16.msra.mxu0 0
    %751 = vmatpush.bf16.msra.mxu0 0
    %752 = vmatpush.bf16.msra.mxu0 0
    %753 = vmatpush.bf16.msra.mxu0 %v586
    %754 = vmatmul.bf16.gmra.mxu0 %v744
    %v755 = vpop.f32.mrf.mxu0
    %v756 = vadd.f32 0.0, %v755
    %v757 = vpop.f32.mrf.mxu0
    %758 = vdwg.mxu0
    %v759 = vadd.f32 %v719, %v756
    %v760 = vperm.slane %v57, 1
    %v761 = vadd.f32 %v601, %v760
    %v762 = vadd.f32 %v759, %v760
    %v763 = vadd.f32 %v55, %v761
    %v764 = vadd.f32 %v56, %v762
    %v765 = vsel %vm58, %v763, 0.0
    %766 = vadd.xlane.f32.xlu0 %v765
    %v767 = vpop.xlane.xlu0 %766
    %v768 = vsel %vm58, %v764, 0.0
    %769 = vadd.xlane.f32.xlu0 %v768
    %v770 = vpop.xlane.xlu0 %769
    %v771 = vmul.f32 %v767, %v71
    %v772 = vmul.f32 %v770, %v71
    %v773 = vsub.f32 %v763, %v771
    %v774 = vsub.f32 %v764, %v772
    %v775 = vmul.f32 %v773, %v773
    %v776 = vmul.f32 %v774, %v774
    %v777 = vsel %vm58, %v775, 0.0
    %778 = vadd.xlane.f32.xlu0 %v777
    %v779 = vpop.xlane.xlu0 %778
    %v780 = vsel %vm58, %v776, 0.0
    %781 = vadd.xlane.f32.xlu0 %v780
    %v782 = vpop.xlane.xlu0 %781
    %v783 = vmul.f32 %v779, %v71
    %v784 = vmul.f32 %v782, %v71
    %v785 = vadd.f32 %v783, 1e-05
    %v786 = vadd.f32 %v784, 1e-05
    %v787 = vrsqrt.pop %v785
    %v788 = vmul.f32 %v787, %v785
    %v789 = vmul.f32 %v788, %v787
    %v790 = vmul.f32 0.5, %v789
    %v791 = vsub.f32 1.5, %v790
    %v792 = vmul.f32 %v787, %v791
    %vm793 = vweird.f32 %v785
    %vm794 = vweird.f32 %v787
    %vm795 = vmor %vm793, %vm794
    %v796 = vsel %vm795, %v787, %v792
    %v797 = vrsqrt.pop %v786
    %v798 = vmul.f32 %v797, %v786
    %v799 = vmul.f32 %v798, %v797
    %v800 = vmul.f32 0.5, %v799
    %v801 = vsub.f32 1.5, %v800
    %v802 = vmul.f32 %v797, %v801
    %vm803 = vweird.f32 %v786
    %vm804 = vweird.f32 %v797
    %vm805 = vmor %vm803, %vm804
    %v806 = vsel %vm805, %v797, %v802
    %v807 = vmul.f32 %v773, %v796
    %v808 = vmul.f32 %v774, %v806
    %v809 = vperm.slane %v57, 4
    %v810 = vmul.f32 %v807, %v809
    %v811 = vmul.f32 %v808, %v809
    %v812 = vperm.slane %v57, 5
    %v813 = vadd.f32 %v810, %v812
    %v814 = vadd.f32 %v811, %v812
    %v815 = vpack.c.bf16 %v814, %v813
    %v816 = vld [vmem:[#allocation2] sm:$0xf]
    %v817 = vld [vmem:[#allocation2 + $0x4] sm:$0xf]
    %v818 = vld [vmem:[#allocation2 + $0x8] sm:$0xf]
    %v819 = vld [vmem:[#allocation2 + $0xc] sm:$0xf]
    %v820 = vperm.slane %v57, 6
    %v825 = vunpack.c.l.b16 %v816
    %v826 = vunpack.c.l.b16 %v817
    %v827 = vunpack.c.l.b16 %v818
    %v828 = vunpack.c.l.b16 %v819
    %v829 = vpack.c.b16 %v826, %v825
    %v830 = vpack.c.b16 %v828, %v827
    %v834 = vsel %vm58, %v815, 0
    %836 = vmatpush.bf16.msra.mxu0 0
    %837 = vmatpush.bf16.msra.mxu0 0
    %838 = vmatpush.bf16.msra.mxu0 0
    %839 = vmatpush.bf16.msra.mxu0 0
    %840 = vmatpush.bf16.msra.mxu0 0
    %841 = vmatpush.bf16.msra.mxu0 0
    %842 = vmatpush.bf16.msra.mxu0 %v830
    %843 = vmatpush.bf16.msra.mxu0 %v829
    %844 = vmatmul.bf16.gmra.mxu0 %v834
    %v845 = vpop.f32.mrf.mxu0
    %v846 = vadd.f32 %v820, %v845
    %v847 = vpop.f32.mrf.mxu0
    %v848 = vadd.f32 %v820, %v847
    %849 = vdwg.mxu0
    %v850 = vmax.f32 %v846, 0.0
    %v851 = vmax.f32 %v848, 0.0
    %v852 = vpack.c.bf16 %v851, %v850
    %v853 = vld [vmem:[%s4] sm:$0xf]
    %v854 = vld [vmem:[%s4 + $0x4] sm:$0xf]
    %v855 = vld [vmem:[%s4 + $0x8] sm:$0xf]
    %v856 = vld [vmem:[%s4 + $0xc] sm:$0xf]
    %v857 = vld [vmem:[%s4 + $0x10] sm:$0xf]
    %v858 = vld [vmem:[%s4 + $0x14] sm:$0xf]
    %v859 = vld [vmem:[%s4 + $0x18] sm:$0xf]
    %v860 = vld [vmem:[%s4 + $0x1c] sm:$0xf]
    %v861 = vperm.slane %v57, 7
    %v870 = vunpack.c.l.b16 %v853
    %v871 = vunpack.c.l.b16 %v854
    %v872 = vunpack.c.l.b16 %v855
    %v873 = vunpack.c.l.b16 %v856
    %v874 = vunpack.c.l.b16 %v857
    %v875 = vunpack.c.l.b16 %v858
    %v876 = vunpack.c.l.b16 %v859
    %v877 = vunpack.c.l.b16 %v860
    %v878 = vpack.c.b16 %v871, %v870
    %v879 = vpack.c.b16 %v873, %v872
    %v880 = vpack.c.b16 %v875, %v874
    %v881 = vpack.c.b16 %v877, %v876
    %vm886 = vcmask 523264
    %v888 = vsel %vm886, %v852, 0
    %890 = vmatpush.bf16.msra.mxu0 0
    %891 = vmatpush.bf16.msra.mxu0 0
    %892 = vmatpush.bf16.msra.mxu0 0
    %893 = vmatpush.bf16.msra.mxu0 0
    %894 = vmatpush.bf16.msra.mxu0 %v881
    %895 = vmatpush.bf16.msra.mxu0 %v880
    %896 = vmatpush.bf16.msra.mxu0 %v879
    %897 = vmatpush.bf16.msra.mxu0 %v878
    %898 = vmatmul.bf16.gmra.mxu0 %v888
    %v899 = vpop.f32.mrf.mxu0
    %v900 = vadd.f32 %v861, %v899
    %v901 = vpop.f32.mrf.mxu0
    %v902 = vadd.f32 %v861, %v901
    %903 = vdwg.mxu0
    %v904 = vadd.f32 %v763, %v900
    %v905 = vadd.f32 %v764, %v902
    %906 = vst.msk [vmem:[#allocation7] sm:$0xff] %vm58, %v904
    %907 = vst.msk [vmem:[#allocation7 + $0x8] sm:$0xff] %vm58, %v905
    // Predicated region
    $region34: #{tpu_custom_call.1} parent=1 // pred_check
      _
    $region35: #{tpu_custom_call.1} parent=1 // pred_check_branch
      %909 = sbr.rel (0) target = $region37
    $region36: #{tpu_custom_call.1} parent=1 // pred_region
      %911 = vsyncadd [#allocation4], 0
      %s912 = sshll.u32 [#allocation7], 4
      %s913 = int_to_ptr.vmem [resolvable:$true] %s912
      %s914 = sshll.u32 %s6, 4
      %s915 = int_to_ptr.hbm [resolvable:$true] %s914
      %920 = dma.vmem_to_hbm [thread:$0]  %s913, 256, %s915, [#allocation4], 128, 128, 8
    $region37: #{tpu_custom_call.1} parent=1 // pred_fallthru
      _
    // Predicated region
    $region38: #{tpu_custom_call.1} parent=1 // pred_check
      _
    $region39: #{tpu_custom_call.1} parent=1 // pred_check_branch
      %922 = sbr.rel (0) target = $region41
    $region40: #{tpu_custom_call.1} parent=1 // pred_region
      %924 = dma.done [#allocation4], 256
    $region41: #{tpu_custom_call.1} parent=1 // pred_fallthru
      _
    %925 = vsyncpa [#allocation3], 1
    %926 = vsyncpa [#allocation6], 1
    %927 = vsyncpa [#allocation4], 1

</llo_original>
